<compile_context>
chip_gen: v6e
topology: v6e:2x2x1
jax: 0.10.0
libtpu: 0.0.40
codegen_flags: <defaults>
</compile_context>

<pallas_src>
import jax
import jax.numpy as jnp
from jax import lax
from jax.experimental import pallas as pl
from jax.experimental.pallas import tpu as pltpu

EPS = 1e-5  # nn.LayerNorm default


def _round_up(a, m):
    return (a + m - 1) // m * m


def _vmem_capacity_bytes():
    try:
        info = pltpu.get_tpu_info()
        cap = getattr(info, "vmem_capacity_bytes", None)
        if cap:
            return int(cap)
    except Exception:
        pass
    return 64 * 1024 * 1024  # conservative (v7x per-TC VMEM)


def _layer_norm_f32(x, gamma, beta):
    # Two-pass variance: robust to large mean offsets (no cancellation).
    mean = jnp.mean(x, axis=-1, keepdims=True)
    xc = x - mean
    var = jnp.mean(xc * xc, axis=-1, keepdims=True)
    return xc * lax.rsqrt(var + EPS) * gamma + beta


def _prenorm_linear_kernel_1d(x_ref, gamma_ref, beta_ref, w_ref, b_ref, o_ref):
    # 1-D grid over row tiles: weight block is grid-invariant (resident in
    # VMEM); LN runs exactly once per row tile.
    x = x_ref[...].astype(jnp.float32)
    y = _layer_norm_f32(x, gamma_ref[...].astype(jnp.float32),
                        beta_ref[...].astype(jnp.float32))
    acc = jnp.dot(y.astype(w_ref.dtype), w_ref[...],
                  preferred_element_type=jnp.float32)
    o_ref[...] = (acc + b_ref[...].astype(jnp.float32)).astype(o_ref.dtype)


def _prenorm_linear_kernel_2d(x_ref, gamma_ref, beta_ref, w_ref, b_ref, o_ref,
                              y_ref):
    # Row axis OUTER, hidden axis INNER.  LN (and the bf16 cast) happens only
    # on the first hidden tile of each row tile; the normalized activations
    # stay resident in the y scratch for the remaining hidden tiles.
    @pl.when(pl.program_id(1) == 0)
    def _():
        x = x_ref[...].astype(jnp.float32)
        y = _layer_norm_f32(x, gamma_ref[...].astype(jnp.float32),
                            beta_ref[...].astype(jnp.float32))
        y_ref[...] = y.astype(y_ref.dtype)

    acc = jnp.dot(y_ref[...], w_ref[...], preferred_element_type=jnp.float32)
    o_ref[...] = (acc + b_ref[...].astype(jnp.float32)).astype(o_ref.dtype)


def prenorm_linear(x, gamma, beta, w, b, *, out_dtype=None,
                   matmul_dtype=jnp.bfloat16, tm=None, tn=None, path=None):
    """x: (B, N, dim) -> (B, N, hidden); pre-LayerNorm then Linear, fused."""
    B, N, dim = x.shape
    hidden = w.shape[1]
    M = B * N
    out_dtype = x.dtype if out_dtype is None else out_dtype

    H_pad = _round_up(hidden, 128)           # lane-dense output stores
    x_bytes = jnp.dtype(x.dtype).itemsize
    o_bytes = jnp.dtype(out_dtype).itemsize
    w_bytes = jnp.dtype(matmul_dtype).itemsize

    cap = _vmem_capacity_bytes()
    budget = max(cap - (16 << 20), 32 << 20)  # leave headroom below physical

    # --- VMEM footprint estimates (double-buffered inputs/outputs + temps) ---
    def foot_1d(tm_):
        return (2 * tm_ * dim * x_bytes            # x
                + 2 * dim * H_pad * w_bytes        # weight (resident)
                + 2 * tm_ * H_pad * o_bytes        # output
                + 2 * tm_ * H_pad * 4              # f32 matmul result
                + 3 * tm_ * dim * 4                # LN f32 temporaries
                + 8 * dim * 4 + 4 * H_pad * 4)

    def foot_2d(tm_, tn_):
        return (2 * tm_ * dim * x_bytes
                + 2 * dim * tn_ * w_bytes
                + 2 * tm_ * tn_ * o_bytes
                + 2 * tm_ * tn_ * 4
                + tm_ * dim * w_bytes              # y scratch
                + 3 * tm_ * dim * 4                # LN f32 temporaries
                + 8 * dim * 4 + 4 * tn_ * 4)

    # --- path / tile selection (per-generation VMEM aware) ---
    if path is None:
        tm_a = min(256 if tm is None else _round_up(tm, 8), _round_up(M, 8))
        path = "1d" if foot_1d(tm_a) <= budget else "2d"

    if path == "1d":
        tm_sel = min(256 if tm is None else _round_up(tm, 8), _round_up(M, 8))
        tn_sel = H_pad
        footprint = foot_1d(tm_sel)
    else:
        tm_sel = min(512 if tm is None else _round_up(tm, 8), _round_up(M, 8))
        tn_sel = min(512 if tn is None else _round_up(tn, 128), H_pad)
        while foot_2d(tm_sel, tn_sel) > budget and tn_sel > 128:
            tn_sel = max(128, (tn_sel // 2) // 128 * 128)
        while foot_2d(tm_sel, tn_sel) > budget and tm_sel > 8:
            tm_sel = max(8, (tm_sel // 2) // 8 * 8)
        footprint = foot_2d(tm_sel, tn_sel)

    vmem_limit = int(min(budget, max(footprint + (8 << 20), 32 << 20)))

    # --- operands (NO padding of x along M; only cheap one-time hidden pad) ---
    x2 = x.reshape(M, dim)
    gamma2 = gamma.reshape(1, dim)
    beta2 = beta.reshape(1, dim)
    wm = w.astype(matmul_dtype)
    bp = b.astype(jnp.float32)
    if H_pad != hidden:
        wm = jnp.pad(wm, ((0, 0), (0, H_pad - hidden)))
        bp = jnp.pad(bp, (0, H_pad - hidden))
    b2 = bp.reshape(1, H_pad)

    if path == "1d":
        grid = (pl.cdiv(M, tm_sel),)
        out = pl.pallas_call(
            _prenorm_linear_kernel_1d,
            out_shape=jax.ShapeDtypeStruct((M, H_pad), out_dtype),
            grid_spec=pltpu.PrefetchScalarGridSpec(
                num_scalar_prefetch=0,
                grid=grid,
                in_specs=[
                    pl.BlockSpec((tm_sel, dim), lambda i: (i, 0)),   # x rows
                    pl.BlockSpec((1, dim), lambda i: (0, 0)),        # gamma
                    pl.BlockSpec((1, dim), lambda i: (0, 0)),        # beta
                    pl.BlockSpec((dim, H_pad), lambda i: (0, 0)),    # weight (resident)
                    pl.BlockSpec((1, H_pad), lambda i: (0, 0)),      # bias
                ],
                out_specs=pl.BlockSpec((tm_sel, H_pad), lambda i: (i, 0)),
            ),
            compiler_params=pltpu.CompilerParams(
                dimension_semantics=("parallel",),
                vmem_limit_bytes=vmem_limit,
            ),
        )(x2, gamma2, beta2, wm, b2)
    else:
        grid = (pl.cdiv(M, tm_sel), pl.cdiv(H_pad, tn_sel))
        out = pl.pallas_call(
            _prenorm_linear_kernel_2d,
            out_shape=jax.ShapeDtypeStruct((M, H_pad), out_dtype),
            grid_spec=pltpu.PrefetchScalarGridSpec(
                num_scalar_prefetch=0,
                grid=grid,
                in_specs=[
                    pl.BlockSpec((tm_sel, dim), lambda i, j: (i, 0)),  # x rows (fetched once per i)
                    pl.BlockSpec((1, dim), lambda i, j: (0, 0)),       # gamma
                    pl.BlockSpec((1, dim), lambda i, j: (0, 0)),       # beta
                    pl.BlockSpec((dim, tn_sel), lambda i, j: (0, j)),  # weight tile
                    pl.BlockSpec((1, tn_sel), lambda i, j: (0, j)),    # bias tile
                ],
                out_specs=pl.BlockSpec((tm_sel, tn_sel), lambda i, j: (i, j)),
                scratch_shapes=[pltpu.VMEM((tm_sel, dim), matmul_dtype)],  # y cache
            ),
            compiler_params=pltpu.CompilerParams(
                dimension_semantics=("parallel", "arbitrary"),
                vmem_limit_bytes=vmem_limit,
            ),
        )(x2, gamma2, beta2, wm, b2)

    if H_pad != hidden:
        out = out[:, :hidden]
    return out.reshape(B, N, hidden)


def prenorm_linear_ref(x, gamma, beta, w, b, out_dtype=None):
    out_dtype = x.dtype if out_dtype is None else out_dtype
    xf = x.astype(jnp.float32)
    mean = jnp.mean(xf, axis=-1, keepdims=True)
    var = jnp.mean((xf - mean) ** 2, axis=-1, keepdims=True)
    y = (xf - mean) / jnp.sqrt(var + EPS) * gamma.astype(jnp.float32) \
        + beta.astype(jnp.float32)
    return (y @ w.astype(jnp.float32) + b.astype(jnp.float32)).astype(out_dtype)


def _run_case(key, B, N, dim, hidden, *, atol=2e-2, rtol=2e-2, **kw):
    kx, kg, kb, kw_, kbias = jax.random.split(key, 5)
    x = jax.random.normal(kx, (B, N, dim), dtype=jnp.float32)
    gamma = 1.0 + 0.02 * jax.random.normal(kg, (dim,), dtype=jnp.float32)
    beta = 0.02 * jax.random.normal(kb, (dim,), dtype=jnp.float32)
    w = jax.random.normal(kw_, (dim, hidden), dtype=jnp.float32) / jnp.sqrt(dim)
    b = 0.01 * jax.random.normal(kbias, (hidden,), dtype=jnp.float32)

    out = jax.block_until_ready(prenorm_linear(x, gamma, beta, w, b, **kw))
    ref = prenorm_linear_ref(x, gamma, beta, w, b, out_dtype=kw.get("out_dtype"))

    assert out.shape == (B, N, hidden)
    assert out.dtype == ref.dtype
    err = jnp.max(jnp.abs(out.astype(jnp.float32) - ref.astype(jnp.float32)))
    assert jnp.allclose(out.astype(jnp.float32), ref.astype(jnp.float32),
                        atol=atol, rtol=rtol), f"max abs err = {err}"


if __name__ == "__main__":
    key = jax.random.PRNGKey(0)
    k1, k2, k3 = jax.random.split(key, 3)

    # Aligned small case: auto path (weight-resident 1-D grid).
    _run_case(k1, B=2, N=8, dim=64, hidden=128)
    # Ragged rows + ragged hidden: no x padding (ragged row block), w/b padded.
    _run_case(k2, B=2, N=7, dim=64, hidden=72)
    # Forced fallback path: row-outer / hidden-inner with VMEM y-cache,
    # multiple hidden tiles, ragged last row block, bf16 output writeback.
    _run_case(k3, B=3, N=8, dim=64, hidden=384, tm=16, tn=128, path="2d",
              out_dtype=jnp.bfloat16, atol=8e-2, rtol=8e-2)

    # TODO(synk): PreNorm.fn is an arbitrary user module in the PyTorch spec;
    # it is represented here by a fused Linear(dim -> hidden).
    print("KERNEL_OK")
</pallas_src>

<mosaic_0001>
module attributes {stable_mosaic.version = 11 : i64} {
  func.func @_prenorm_linear_kernel_1d(%arg0: i32, %arg1: memref<16x64xf32, #tpu.memory_space<vmem>>, %arg2: memref<1x64xf32, #tpu.memory_space<vmem>>, %arg3: memref<1x64xf32, #tpu.memory_space<vmem>>, %arg4: memref<64x128xbf16, #tpu.memory_space<vmem>>, %arg5: memref<1x128xf32, #tpu.memory_space<vmem>>, %arg6: memref<16x128xf32, #tpu.memory_space<vmem>>) attributes {dimension_semantics = [#tpu.dimension_semantics<parallel>], iteration_bounds = array<i64: 1>, scalar_prefetch = 0 : i64, scratch_operands = 0 : i64, tpu.core_type = #tpu.core_type<tc>, window_params = [{transform_indices = @transform_0, window_bounds = array<i64: 16, 64>}, {pipeline_mode = #tpu.pipeline_mode<synchronous>, transform_indices = @transform_1, window_bounds = array<i64: 1, 64>}, {pipeline_mode = #tpu.pipeline_mode<synchronous>, transform_indices = @transform_2, window_bounds = array<i64: 1, 64>}, {pipeline_mode = #tpu.pipeline_mode<synchronous>, transform_indices = @transform_3, window_bounds = array<i64: 64, 128>}, {pipeline_mode = #tpu.pipeline_mode<synchronous>, transform_indices = @transform_4, window_bounds = array<i64: 1, 128>}, {transform_indices = @transform_5, window_bounds = array<i64: 16, 128>}]} {
    %c0 = arith.constant 0 : index
    %c0_0 = arith.constant 0 : index
    %0 = vector.load %arg1[%c0, %c0_0] : memref<16x64xf32, #tpu.memory_space<vmem>>, vector<16x64xf32>
    %c0_1 = arith.constant 0 : index
    %c0_2 = arith.constant 0 : index
    %1 = vector.load %arg2[%c0_1, %c0_2] : memref<1x64xf32, #tpu.memory_space<vmem>>, vector<1x64xf32>
    %c0_3 = arith.constant 0 : index
    %c0_4 = arith.constant 0 : index
    %2 = vector.load %arg3[%c0_3, %c0_4] : memref<1x64xf32, #tpu.memory_space<vmem>>, vector<1x64xf32>
    %cst = arith.constant dense<0.000000e+00> : vector<16xf32>
    %3 = vector.multi_reduction <add>, %0, %cst [1] : vector<16x64xf32> to vector<16xf32>
    %4 = vector.shape_cast %3 : vector<16xf32> to vector<16x1xf32>
    %cst_5 = arith.constant 6.400000e+01 : f32
    %5 = vector.broadcast %cst_5 : f32 to vector<16x1xf32>
    %6 = arith.divf %4, %5 : vector<16x1xf32>
    %7 = vector.broadcast %6 : vector<16x1xf32> to vector<16x64xf32>
    %8 = arith.subf %0, %7 : vector<16x64xf32>
    %9 = arith.mulf %8, %8 : vector<16x64xf32>
    %cst_6 = arith.constant dense<0.000000e+00> : vector<16xf32>
    %10 = vector.multi_reduction <add>, %9, %cst_6 [1] : vector<16x64xf32> to vector<16xf32>
    %11 = vector.shape_cast %10 : vector<16xf32> to vector<16x1xf32>
    %cst_7 = arith.constant 6.400000e+01 : f32
    %12 = vector.broadcast %cst_7 : f32 to vector<16x1xf32>
    %13 = arith.divf %11, %12 : vector<16x1xf32>
    %cst_8 = arith.constant 9.99999974E-6 : f32
    %14 = vector.broadcast %cst_8 : f32 to vector<16x1xf32>
    %15 = arith.addf %13, %14 : vector<16x1xf32>
    %16 = math.rsqrt %15 : vector<16x1xf32>
    %17 = vector.broadcast %16 : vector<16x1xf32> to vector<16x64xf32>
    %18 = arith.mulf %8, %17 : vector<16x64xf32>
    %19 = vector.broadcast %1 : vector<1x64xf32> to vector<16x64xf32>
    %20 = arith.mulf %18, %19 : vector<16x64xf32>
    %21 = vector.broadcast %2 : vector<1x64xf32> to vector<16x64xf32>
    %22 = arith.addf %20, %21 : vector<16x64xf32>
    %23 = arith.truncf %22 : vector<16x64xf32> to vector<16x64xbf16>
    %c0_9 = arith.constant 0 : index
    %c0_10 = arith.constant 0 : index
    %24 = vector.load %arg4[%c0_9, %c0_10] : memref<64x128xbf16, #tpu.memory_space<vmem>>, vector<64x128xbf16>
    %cst_11 = arith.constant dense<0.000000e+00> : vector<16x128xf32>
    %25 = tpu.matmul %23, %24, %cst_11 {dimension_numbers = #tpu.dot_dimension_numbers<[1], [0], [0], [1], [0, 0, 1, 1], [], []>} : vector<16x64xbf16>, vector<64x128xbf16>, vector<16x128xf32> -> vector<16x128xf32>
    %c0_12 = arith.constant 0 : index
    %c0_13 = arith.constant 0 : index
    %26 = vector.load %arg5[%c0_12, %c0_13] : memref<1x128xf32, #tpu.memory_space<vmem>>, vector<1x128xf32>
    %27 = vector.broadcast %26 : vector<1x128xf32> to vector<16x128xf32>
    %28 = arith.addf %25, %27 : vector<16x128xf32>
    %c0_14 = arith.constant 0 : index
    %c0_15 = arith.constant 0 : index
    %29 = vector.load %arg6[%c0_14, %c0_15] : memref<16x128xf32, #tpu.memory_space<vmem>>, vector<16x128xf32>
    tpu.vector_store %arg6[%c0_14, %c0_15], %28 {strides = array<i32>} : memref<16x128xf32, #tpu.memory_space<vmem>>, vector<16x128xf32>,
    return
  }
  func.func @transform_0(%arg0: i32) -> (i32, i32) {
    %c0_i32 = arith.constant 0 : i32
    %c0_i32_0 = arith.constant 0 : i32
    return %arg0, %c0_i32 : i32, i32
  }
  func.func @transform_1(%arg0: i32) -> (i32, i32) {
    %c0_i32 = arith.constant 0 : i32
    %c0_i32_0 = arith.constant 0 : i32
    %c0_i32_1 = arith.constant 0 : i32
    return %c0_i32, %c0_i32_0 : i32, i32
  }
  func.func @transform_2(%arg0: i32) -> (i32, i32) {
    %c0_i32 = arith.constant 0 : i32
    %c0_i32_0 = arith.constant 0 : i32
    %c0_i32_1 = arith.constant 0 : i32
    return %c0_i32, %c0_i32_0 : i32, i32
  }
  func.func @transform_3(%arg0: i32) -> (i32, i32) {
    %c0_i32 = arith.constant 0 : i32
    %c0_i32_0 = arith.constant 0 : i32
    %c0_i32_1 = arith.constant 0 : i32
    return %c0_i32, %c0_i32_0 : i32, i32
  }
  func.func @transform_4(%arg0: i32) -> (i32, i32) {
    %c0_i32 = arith.constant 0 : i32
    %c0_i32_0 = arith.constant 0 : i32
    %c0_i32_1 = arith.constant 0 : i32
    return %c0_i32, %c0_i32_0 : i32, i32
  }
  func.func @transform_5(%arg0: i32) -> (i32, i32) {
    %c0_i32 = arith.constant 0 : i32
    %c0_i32_0 = arith.constant 0 : i32
    return %arg0, %c0_i32 : i32, i32
  }
}

</mosaic_0001>

<llo_original>
// kernel: tpu_custom_call.1
$region0: #{tpu_custom_call.1}
  #allocation0 [shape = 'u32[]', space=smem, size = 0x4, offset = 0x4, fixed_abs, tag = 'smem constant byte address 0x4 - core index']
  #allocation1 [shape = 'u32[144,128]{1,0:T(1,128)}', space=vmem, size = 0x12000, scoped, tag = 'internal scratch']
  %s0 = inlined_call_operand.hbm [shape: f32[16,64], index: 0, kind: input, shape index: {}]
  %s1 = inlined_call_operand.vmem [shape: f32[1,64], index: 1, kind: input, shape index: {}]
  %s2 = inlined_call_operand.vmem [shape: f32[1,64], index: 2, kind: input, shape index: {}]
  %s3 = inlined_call_operand.hbm [shape: bf16[64,128], index: 3, kind: input, shape index: {}]
  %s4 = inlined_call_operand.vmem [shape: f32[1,128], index: 4, kind: input, shape index: {}]
  %s5 = inlined_call_operand.hbm [shape: f32[16,128], index: 5, kind: output, shape index: {}]
  %s6 = sld [smem:[#allocation0]]
  $region38: #{tpu_custom_call.1} parent=0
    _
  %s8 = ssub.s32 1, %s6
  %s9 = scalar_select 0, %s8, %s6
  $region1: #{tpu_custom_call.1} parent=0
    #allocation2 [shape = 'u8[8192]{0}', space=vmem, size = 0x2000, scoped, tag = 'input window, operand 0, single buffered']
    #allocation3 [shape = 's32[1]{0}', space=sflag, size = 0x4, scoped, tag = 'scoped memory for tpu_custom_call.1']
    #allocation4 [shape = 's32[1]{0}', space=sflag, size = 0x4, scoped, tag = 'scoped memory for tpu_custom_call.1']
    #allocation5 [shape = 'u8[16384]{0}', space=vmem, size = 0x4000, scoped, tag = 'input window, operand 3, single buffered']
    #allocation6 [shape = 's32[1]{0}', space=sflag, size = 0x4, scoped, tag = 'scoped memory for tpu_custom_call.1']
    #allocation7 [shape = 'u8[8192]{0}', space=vmem, size = 0x2000, scoped, tag = 'output window, operand 0, single buffered']
    %10 = vsyncpa [#allocation3], 0
    %11 = vsyncpa [#allocation6], 0
    %12 = vsyncpa [#allocation4], 0
    // Predicated region
    $region2: #{tpu_custom_call.1} parent=1 // pred_check
      _
    $region3: #{tpu_custom_call.1} parent=1 // pred_check_branch
      %14 = sbr.rel (0) target = $region5
    $region4: #{tpu_custom_call.1} parent=1 // pred_region
      %s16 = ssub.s32 256, 256
      %17 = vsyncadd [#allocation3], %s16
      %s18 = sshll.u32 [#allocation2], 4
      %s19 = int_to_ptr.vmem [resolvable:$true] %s18
      %24 = dma.hbm_to_vmem [thread:$0]  %s0, 256, %s19, [#allocation3], 128, 128, 8
    $region5: #{tpu_custom_call.1} parent=1 // pred_fallthru
      _
    // Predicated region
    $region6: #{tpu_custom_call.1} parent=1 // pred_check
      _
    $region7: #{tpu_custom_call.1} parent=1 // pred_check_branch
      %26 = sbr.rel (0) target = $region9
    $region8: #{tpu_custom_call.1} parent=1 // pred_region
      _
    $region9: #{tpu_custom_call.1} parent=1 // pred_fallthru
      _
    // Predicated region
    $region10: #{tpu_custom_call.1} parent=1 // pred_check
      _
    $region11: #{tpu_custom_call.1} parent=1 // pred_check_branch
      %28 = sbr.rel (0) target = $region13
    $region12: #{tpu_custom_call.1} parent=1 // pred_region
      _
    $region13: #{tpu_custom_call.1} parent=1 // pred_fallthru
      _
    // Predicated region
    $region14: #{tpu_custom_call.1} parent=1 // pred_check
      _
    $region15: #{tpu_custom_call.1} parent=1 // pred_check_branch
      %30 = sbr.rel (0) target = $region17
    $region16: #{tpu_custom_call.1} parent=1 // pred_region
      %s32 = ssub.s32 512, 512
      %33 = vsyncadd [#allocation6], %s32
      %s34 = sshll.u32 [#allocation5], 4
      %s35 = int_to_ptr.vmem [resolvable:$true] %s34
      %40 = dma.hbm_to_vmem [thread:$0]  %s3, 512, %s35, [#allocation6], 64, 64, 4
    $region17: #{tpu_custom_call.1} parent=1 // pred_fallthru
      _
    // Predicated region
    $region18: #{tpu_custom_call.1} parent=1 // pred_check
      _
    $region19: #{tpu_custom_call.1} parent=1 // pred_check_branch
      %42 = sbr.rel (0) target = $region21
    $region20: #{tpu_custom_call.1} parent=1 // pred_region
      _
    $region21: #{tpu_custom_call.1} parent=1 // pred_fallthru
      _
    // Predicated region
    $region22: #{tpu_custom_call.1} parent=1 // pred_check
      _
    $region23: #{tpu_custom_call.1} parent=1 // pred_check_branch
      %44 = sbr.rel (0) target = $region25
    $region24: #{tpu_custom_call.1} parent=1 // pred_region
      %45 = dma.done [#allocation3], 256
    $region25: #{tpu_custom_call.1} parent=1 // pred_fallthru
      _
    // Predicated region
    $region26: #{tpu_custom_call.1} parent=1 // pred_check
      _
    $region27: #{tpu_custom_call.1} parent=1 // pred_check_branch
      %47 = sbr.rel (0) target = $region29
    $region28: #{tpu_custom_call.1} parent=1 // pred_region
      %48 = dma.done [#allocation6], 512
    $region29: #{tpu_custom_call.1} parent=1 // pred_fallthru
      _
    %v50 = vld [vmem:[#allocation2] sm:$0xff]
    %v51 = vld [vmem:[#allocation2 + $0x8] sm:$0xff]
    %v52 = vld [vmem:[%s1] sm:$0x1]
    %v53 = vld [vmem:[%s2] sm:$0x1]
    %vm54 = vcmask 523264
    %v55 = vsel %vm54, %v50, 0.0
    %56 = vadd.xlane.f32.xlu0 %v55
    %v57 = vpop.xlane.xlu0 %56
    %v58 = vsel %vm54, %v51, 0.0
    %59 = vadd.xlane.f32.xlu0 %v58
    %v60 = vpop.xlane.xlu0 %59
    %v61 = vrcp.pop 64.0
    %v62 = vmul.f32 %v57, %v61
    %v63 = vmul.f32 %v60, %v61
    %v64 = vsub.f32 %v50, %v62
    %v65 = vsub.f32 %v51, %v63
    %v66 = vmul.f32 %v64, %v64
    %v67 = vmul.f32 %v65, %v65
    %v68 = vsel %vm54, %v66, 0.0
    %69 = vadd.xlane.f32.xlu0 %v68
    %v70 = vpop.xlane.xlu0 %69
    %v71 = vsel %vm54, %v67, 0.0
    %72 = vadd.xlane.f32.xlu0 %v71
    %v73 = vpop.xlane.xlu0 %72
    %v74 = vmul.f32 %v70, %v61
    %v75 = vmul.f32 %v73, %v61
    %v76 = vadd.f32 %v74, 1e-05
    %v77 = vadd.f32 %v75, 1e-05
    %v78 = vrsqrt.pop %v76
    %v79 = vrsqrt.pop %v77
    %v80 = vmul.f32 %v64, %v78
    %v81 = vmul.f32 %v65, %v79
    %v83 = vlaneseq
    %v84 = vshrl.u32 %v83, 7
    %v85 = vsub.s32 0, %v84
    %v86 = vrot.slane %v52, %v85
    %v88 = vmul.f32 %v80, %v86
    %v89 = vmul.f32 %v81, %v86
    %v91 = vlaneseq
    %v92 = vshrl.u32 %v91, 7
    %v93 = vsub.s32 0, %v92
    %v94 = vrot.slane %v53, %v93
    %v96 = vadd.f32 %v88, %v94
    %v97 = vadd.f32 %v89, %v94
    %v98 = vpack.c.bf16 %v97, %v96
    %v99 = vld [vmem:[#allocation5] sm:$0xf]
    %v100 = vld [vmem:[#allocation5 + $0x4] sm:$0xf]
    %v101 = vld [vmem:[#allocation5 + $0x8] sm:$0xf]
    %v102 = vld [vmem:[#allocation5 + $0xc] sm:$0xf]
    %v103 = vld [vmem:[#allocation5 + $0x10] sm:$0xf]
    %v104 = vld [vmem:[#allocation5 + $0x14] sm:$0xf]
    %v105 = vld [vmem:[#allocation5 + $0x18] sm:$0xf]
    %v106 = vld [vmem:[#allocation5 + $0x1c] sm:$0xf]
    %v107 = vld [vmem:[%s4] sm:$0x1]
    %v109 = vlaneseq
    %v110 = vshrl.u32 %v109, 7
    %v111 = vsub.s32 0, %v110
    %v112 = vrot.slane %v107, %v111
    %v122 = vunpack.c.l.b16 %v99
    %v123 = vunpack.c.l.b16 %v100
    %v124 = vunpack.c.l.b16 %v101
    %v125 = vunpack.c.l.b16 %v102
    %v126 = vunpack.c.l.b16 %v103
    %v127 = vunpack.c.l.b16 %v104
    %v128 = vunpack.c.l.b16 %v105
    %v129 = vunpack.c.l.b16 %v106
    %v130 = vpack.c.b16 %v123, %v122
    %v131 = vpack.c.b16 %v125, %v124
    %v132 = vpack.c.b16 %v127, %v126
    %v133 = vpack.c.b16 %v129, %v128
    %v139 = vsel %vm54, %v98, 0
    %141 = vmatprep.subr.bf16.mxu0 0
    %142 = vmatpush1.bf16.msra.mxu0 0
    %143 = vmatprep.subr.bf16.mxu0 0
    %144 = vmatpush1.bf16.msra.mxu0 0
    %145 = vmatprep.subr.bf16.mxu0 0
    %146 = vmatpush1.bf16.msra.mxu0 0
    %147 = vmatprep.subr.bf16.mxu0 0
    %148 = vmatpush1.bf16.msra.mxu0 0
    %149 = vmatprep.subr.bf16.mxu0 0
    %150 = vmatpush1.bf16.msra.mxu0 %v133
    %151 = vmatprep.subr.bf16.mxu0 0
    %152 = vmatpush1.bf16.msra.mxu0 %v132
    %153 = vmatprep.subr.bf16.mxu0 0
    %154 = vmatpush1.bf16.msra.mxu0 %v131
    %155 = vmatprep.subr.bf16.mxu0 0
    %156 = vmatpush1.bf16.msra.mxu0 %v130
    %157 = vmatprep.subr.bf16.mxu0 0
    %158 = vmatpush2.bf16.msra.mxu0 0
    %159 = vmatprep.subr.bf16.mxu0 0
    %160 = vmatpush2.bf16.msra.mxu0 0
    %161 = vmatprep.subr.bf16.mxu0 0
    %162 = vmatpush2.bf16.msra.mxu0 0
    %163 = vmatprep.subr.bf16.mxu0 0
    %164 = vmatpush2.bf16.msra.mxu0 0
    %165 = vmatprep.subr.bf16.mxu0 0
    %166 = vmatpush2.bf16.msra.mxu0 0
    %167 = vmatprep.subr.bf16.mxu0 0
    %168 = vmatpush2.bf16.msra.mxu0 0
    %169 = vmatprep.subr.bf16.mxu0 0
    %170 = vmatpush2.bf16.msra.mxu0 0
    %171 = vmatprep.subr.bf16.mxu0 0
    %172 = vmatpush2.bf16.msra.mxu0 0
    %173 = vmatprep.mubr.bf16.mxu0 0
    %174 = vmatmul.mubr.bf16.gmra.mxu0 %v139
    %v175 = vpop.f32.mrf.mxu0
    %v176 = vadd.f32 %v112, %v175
    %v177 = vpop.f32.mrf.mxu0
    %v178 = vpop.f32.mrf.mxu0
    %v179 = vadd.f32 %v112, %v178
    %v180 = vpop.f32.mrf.mxu0
    %181 = vdwg.mxu0
    %182 = vst [vmem:[#allocation7] sm:$0xff] %v176
    %183 = vst [vmem:[#allocation7 + $0x8] sm:$0xff] %v179
    // Predicated region
    $region30: #{tpu_custom_call.1} parent=1 // pred_check
      _
    $region31: #{tpu_custom_call.1} parent=1 // pred_check_branch
      %185 = sbr.rel (0) target = $region33
    $region32: #{tpu_custom_call.1} parent=1 // pred_region
      %s187 = ssub.s32 256, 256
      %188 = vsyncadd [#allocation4], %s187
      %s189 = sshll.u32 [#allocation7], 4
      %s190 = int_to_ptr.vmem [resolvable:$true] %s189
      %195 = dma.vmem_to_hbm [thread:$0]  %s190, 256, %s5, [#allocation4], 128, 128, 8
    $region33: #{tpu_custom_call.1} parent=1 // pred_fallthru
      _
    // Predicated region
    $region34: #{tpu_custom_call.1} parent=1 // pred_check
      _
    $region35: #{tpu_custom_call.1} parent=1 // pred_check_branch
      %197 = sbr.rel (0) target = $region37
    $region36: #{tpu_custom_call.1} parent=1 // pred_region
      %198 = dma.done [#allocation4], 256
    $region37: #{tpu_custom_call.1} parent=1 // pred_fallthru
      _
    %199 = vsyncpa [#allocation3], 1
    %200 = vsyncpa [#allocation6], 1
    %201 = vsyncpa [#allocation4], 1

</llo_original>
